<compile_context>
chip_gen: v7x
topology: tpu7x:2x2x1
jax: 0.10.0
libtpu: 0.0.40
codegen_flags: <defaults>
</compile_context>

<pallas_src>
import jax
import jax.numpy as jnp
from jax.experimental import pallas as pl
from jax.experimental.pallas import tpu as pltpu

K = 5      # depthwise kernel size
PAD = 2    # spatial padding (matches the PyTorch module)


def encoder_kernel(xpadh_ref, bw1_ref, bw2_ref, o_ref, tpad_ref):
    """One batch image per grid step.

    xpadh_ref : (1, H+2*PAD, W*C)   f32  H-padded, lane-packed input (lane index = w*C + c)
    bw1_ref   : (K, W*C,  W*Cm)     f32  banded fused weights for separable conv #1 (per dy)
    bw2_ref   : (K, W*Cm, W*C )     f32  banded fused weights for separable conv #2 (per dy)
    o_ref     : (1, H, W*C)         f32  output  x + double_conv(x)   (lane-dense store)
    tpad_ref  : (H+2*PAD, W*Cm)     f32  VMEM scratch: H-padded intermediate
    """
    hp = xpadh_ref.shape[1]
    h = o_ref.shape[1]
    pad = (hp - h) // 2
    k = bw1_ref.shape[0]
    wcm = bw1_ref.shape[2]

    # --- fused separable conv #1:  acc1 = sum_dy  x_rows(dy) @ banded_W1[dy]   (MXU)
    # NOTE: on v6e/v7x the dot operands could be cast to bf16 (f32 accumulation kept via
    # preferred_element_type) for higher MXU throughput; left in f32 to match torch semantics.
    acc1 = jnp.dot(xpadh_ref[0, 0:h, :], bw1_ref[0],
                   preferred_element_type=jnp.float32)
    for dy in range(1, k):
        acc1 = acc1 + jnp.dot(xpadh_ref[0, dy:dy + h, :], bw1_ref[dy],
                              preferred_element_type=jnp.float32)
    t = jnp.maximum(acc1, 0.0)                       # ReLU, shape (H, W*Cm)

    # --- H-pad the intermediate in a tiny scratch: zero ONLY the halo rows, write body once.
    # Kept unconditional on purpose: the scratch persists across grid steps and the grid
    # axis is "parallel", so a first-iteration guard would be unsafe on megacore.
    tpad_ref[0:pad, :] = jnp.zeros((pad, wcm), jnp.float32)
    tpad_ref[pad + h:hp, :] = jnp.zeros((pad, wcm), jnp.float32)
    tpad_ref[pad:pad + h, :] = t

    # --- fused separable conv #2, same banded-matmul trick
    acc2 = jnp.dot(tpad_ref[0:h, :], bw2_ref[0],
                   preferred_element_type=jnp.float32)
    for dy in range(1, k):
        acc2 = acc2 + jnp.dot(tpad_ref[dy:dy + h, :], bw2_ref[dy],
                              preferred_element_type=jnp.float32)

    # --- residual add + lane-dense store (last dim = W*C, a multiple of 128 here)
    o_ref[0] = acc2 + xpadh_ref[0, pad:pad + h, :]


def _banded_weights(wc, width):
    """wc: (K, K, Cin, Cout) fused 5x5 weights -> (K, W*Cin, W*Cout) banded matrices.

    band[dy, wp*Cin + ci, w*Cout + co] = wc[dy, wp - w + PAD, ci, co] when the dx tap is
    in range; otherwise 0 (this also encodes the zero padding at the W boundary).
    """
    k, _, cin, cout = wc.shape
    pad = (k - 1) // 2
    wp = jnp.arange(width)[:, None]          # source column index
    w = jnp.arange(width)[None, :]           # output column index
    dx = wp - w + pad                        # (W, W)
    valid = (dx >= 0) & (dx < k)
    g = wc[:, jnp.clip(dx, 0, k - 1)]        # (K, W(wp), W(w), Cin, Cout)
    g = g * valid[None, :, :, None, None].astype(wc.dtype)
    g = jnp.transpose(g, (0, 1, 3, 2, 4))    # (K, wp, Cin, w, Cout)
    return g.reshape(k, width * cin, width * cout)


def encoder_forward(x_nchw, wdw1_t, wpw1_t, wdw2_t, wpw2_t):
    """x_nchw: (N,C,H,W).  Torch layouts: dw (C,1,5,5)/(Cm,1,5,5), pw (Cout,Cin,1,1)."""
    N, C, H, W = x_nchw.shape
    Cm = wpw1_t.shape[0]
    WC, WCm = W * C, W * Cm
    Hp = H + 2 * PAD

    # Lane-dense packing: (N,C,H,W) -> (N,H,W*C); pad H only (W handled inside the band).
    x_packed = jnp.transpose(x_nchw, (0, 2, 3, 1)).reshape(N, H, WC)
    xpadh = jnp.pad(x_packed, ((0, 0), (PAD, PAD), (0, 0)))

    # Fuse depthwise + pointwise (exact: no nonlinearity between them).
    dw1 = jnp.transpose(wdw1_t[:, 0], (1, 2, 0))               # (K, K, C)
    pw1 = jnp.transpose(wpw1_t[:, :, 0, 0], (1, 0))            # (C, Cm)
    wc1 = dw1[:, :, :, None] * pw1[None, None, :, :]           # (K, K, C, Cm)
    dw2 = jnp.transpose(wdw2_t[:, 0], (1, 2, 0))               # (K, K, Cm)
    pw2 = jnp.transpose(wpw2_t[:, :, 0, 0], (1, 0))            # (Cm, C)
    wc2 = dw2[:, :, :, None] * pw2[None, None, :, :]           # (K, K, Cm, C)

    # Per-dy banded weight matrices (one-time weight repack, outside the hot kernel).
    bw1 = _banded_weights(wc1, W)                              # (K, W*C,  W*Cm)
    bw2 = _banded_weights(wc2, W)                              # (K, W*Cm, W*C)

    out_packed = pl.pallas_call(
        encoder_kernel,
        out_shape=jax.ShapeDtypeStruct((N, H, WC), jnp.float32),
        grid_spec=pltpu.PrefetchScalarGridSpec(
            num_scalar_prefetch=0,
            grid=(N,),
            in_specs=[
                pl.BlockSpec((1, Hp, WC), lambda n: (n, 0, 0)),
                pl.BlockSpec((K, WC, WCm), lambda n: (0, 0, 0)),
                pl.BlockSpec((K, WCm, WC), lambda n: (0, 0, 0)),
            ],
            out_specs=pl.BlockSpec((1, H, WC), lambda n: (n, 0, 0)),
            scratch_shapes=[pltpu.VMEM((Hp, WCm), jnp.float32)],
        ),
        compiler_params=pltpu.CompilerParams(
            dimension_semantics=("parallel",),     # batch splits across v7x's 2 TensorCores
            vmem_limit_bytes=32 * 1024 * 1024,
        ),
    )(xpadh, bw1, bw2)

    # Unpack back to NCHW.
    return jnp.transpose(out_packed.reshape(N, H, W, C), (0, 3, 1, 2))


def reference_forward(x, wdw1_t, wpw1_t, wdw2_t, wpw2_t):
    """Plain-JAX reference matching the PyTorch module (NCHW)."""
    dn = ("NCHW", "OIHW", "NCHW")
    y = jax.lax.conv_general_dilated(x, wdw1_t, (1, 1), ((PAD, PAD), (PAD, PAD)),
                                     dimension_numbers=dn,
                                     feature_group_count=x.shape[1])
    y = jax.lax.conv_general_dilated(y, wpw1_t, (1, 1), "VALID",
                                     dimension_numbers=dn)
    y = jnp.maximum(y, 0.0)
    y = jax.lax.conv_general_dilated(y, wdw2_t, (1, 1), ((PAD, PAD), (PAD, PAD)),
                                     dimension_numbers=dn,
                                     feature_group_count=y.shape[1])
    y = jax.lax.conv_general_dilated(y, wpw2_t, (1, 1), "VALID",
                                     dimension_numbers=dn)
    return x + y


if __name__ == "__main__":
    # Encoder(in_channels=8, out_channels=8)  => mid channels = 8 // 4 = 2
    N, C, H, W = 2, 8, 16, 16          # W * C = 128 -> fully lane-dense kernel layout
    Cm = C // 4

    key = jax.random.PRNGKey(0)
    k1, k2, k3, k4, k5 = jax.random.split(key, 5)
    x = jax.random.normal(k1, (N, C, H, W), jnp.float32)
    # torch-layout parameters (deterministic synthetic init, no checkpoint)
    wdw1_t = 0.1 * jax.random.normal(k2, (C, 1, K, K), jnp.float32)    # depthwise 1
    wpw1_t = 0.1 * jax.random.normal(k3, (Cm, C, 1, 1), jnp.float32)   # pointwise 1
    wdw2_t = 0.1 * jax.random.normal(k4, (Cm, 1, K, K), jnp.float32)   # depthwise 2
    wpw2_t = 0.1 * jax.random.normal(k5, (C, Cm, 1, 1), jnp.float32)   # pointwise 2

    out = jax.block_until_ready(encoder_forward(x, wdw1_t, wpw1_t, wdw2_t, wpw2_t))
    ref = jax.block_until_ready(reference_forward(x, wdw1_t, wpw1_t, wdw2_t, wpw2_t))

    assert out.shape == (N, C, H, W)
    assert jnp.allclose(out, ref, atol=2e-4, rtol=2e-4), \
        f"max err {jnp.max(jnp.abs(out - ref))}"

    print("KERNEL_OK")
</pallas_src>

<mosaic_0001>
module attributes {stable_mosaic.version = 11 : i64} {
  func.func @encoder_kernel(%arg0: i32, %arg1: memref<1x20x128xf32, #tpu.memory_space<vmem>>, %arg2: memref<5x128x32xf32, #tpu.memory_space<vmem>>, %arg3: memref<5x32x128xf32, #tpu.memory_space<vmem>>, %arg4: memref<1x16x128xf32, #tpu.memory_space<vmem>>, %arg5: memref<20x32xf32, #tpu.memory_space<vmem>>) attributes {dimension_semantics = [#tpu.dimension_semantics<parallel>], iteration_bounds = array<i64: 2>, scalar_prefetch = 0 : i64, scratch_operands = 1 : i64, tpu.core_type = #tpu.core_type<tc>, window_params = [{transform_indices = @transform_0, window_bounds = array<i64: 1, 20, 128>}, {pipeline_mode = #tpu.pipeline_mode<synchronous>, transform_indices = @transform_1, window_bounds = array<i64: 5, 128, 32>}, {pipeline_mode = #tpu.pipeline_mode<synchronous>, transform_indices = @transform_2, window_bounds = array<i64: 5, 32, 128>}, {transform_indices = @transform_3, window_bounds = array<i64: 1, 16, 128>}]} {
    %c0 = arith.constant 0 : index
    %c0_0 = arith.constant 0 : index
    %c0_1 = arith.constant 0 : index
    %0 = vector.load %arg1[%c0, %c0_0, %c0_1] : memref<1x20x128xf32, #tpu.memory_space<vmem>>, vector<1x16x128xf32>
    %1 = vector.shape_cast %0 : vector<1x16x128xf32> to vector<16x128xf32>
    %c0_2 = arith.constant 0 : index
    %c0_3 = arith.constant 0 : index
    %c0_4 = arith.constant 0 : index
    %2 = vector.load %arg2[%c0_2, %c0_3, %c0_4] : memref<5x128x32xf32, #tpu.memory_space<vmem>>, vector<1x128x32xf32>
    %3 = vector.shape_cast %2 : vector<1x128x32xf32> to vector<128x32xf32>
    %cst = arith.constant dense<0.000000e+00> : vector<16x32xf32>
    %4 = tpu.matmul %1, %3, %cst {dimension_numbers = #tpu.dot_dimension_numbers<[1], [0], [0], [1], [0, 0, 1, 1], [], []>} : vector<16x128xf32>, vector<128x32xf32>, vector<16x32xf32> -> vector<16x32xf32>
    %c0_5 = arith.constant 0 : index
    %c1 = arith.constant 1 : index
    %c0_6 = arith.constant 0 : index
    %5 = vector.load %arg1[%c0_5, %c1, %c0_6] : memref<1x20x128xf32, #tpu.memory_space<vmem>>, vector<1x16x128xf32>
    %6 = vector.shape_cast %5 : vector<1x16x128xf32> to vector<16x128xf32>
    %c1_7 = arith.constant 1 : index
    %c0_8 = arith.constant 0 : index
    %c0_9 = arith.constant 0 : index
    %7 = vector.load %arg2[%c1_7, %c0_8, %c0_9] : memref<5x128x32xf32, #tpu.memory_space<vmem>>, vector<1x128x32xf32>
    %8 = vector.shape_cast %7 : vector<1x128x32xf32> to vector<128x32xf32>
    %cst_10 = arith.constant dense<0.000000e+00> : vector<16x32xf32>
    %9 = tpu.matmul %6, %8, %cst_10 {dimension_numbers = #tpu.dot_dimension_numbers<[1], [0], [0], [1], [0, 0, 1, 1], [], []>} : vector<16x128xf32>, vector<128x32xf32>, vector<16x32xf32> -> vector<16x32xf32>
    %10 = arith.addf %4, %9 : vector<16x32xf32>
    %c0_11 = arith.constant 0 : index
    %c2 = arith.constant 2 : index
    %c0_12 = arith.constant 0 : index
    %11 = vector.load %arg1[%c0_11, %c2, %c0_12] : memref<1x20x128xf32, #tpu.memory_space<vmem>>, vector<1x16x128xf32>
    %12 = vector.shape_cast %11 : vector<1x16x128xf32> to vector<16x128xf32>
    %c2_13 = arith.constant 2 : index
    %c0_14 = arith.constant 0 : index
    %c0_15 = arith.constant 0 : index
    %13 = vector.load %arg2[%c2_13, %c0_14, %c0_15] : memref<5x128x32xf32, #tpu.memory_space<vmem>>, vector<1x128x32xf32>
    %14 = vector.shape_cast %13 : vector<1x128x32xf32> to vector<128x32xf32>
    %cst_16 = arith.constant dense<0.000000e+00> : vector<16x32xf32>
    %15 = tpu.matmul %12, %14, %cst_16 {dimension_numbers = #tpu.dot_dimension_numbers<[1], [0], [0], [1], [0, 0, 1, 1], [], []>} : vector<16x128xf32>, vector<128x32xf32>, vector<16x32xf32> -> vector<16x32xf32>
    %16 = arith.addf %10, %15 : vector<16x32xf32>
    %c0_17 = arith.constant 0 : index
    %c3 = arith.constant 3 : index
    %c0_18 = arith.constant 0 : index
    %17 = vector.load %arg1[%c0_17, %c3, %c0_18] : memref<1x20x128xf32, #tpu.memory_space<vmem>>, vector<1x16x128xf32>
    %18 = vector.shape_cast %17 : vector<1x16x128xf32> to vector<16x128xf32>
    %c3_19 = arith.constant 3 : index
    %c0_20 = arith.constant 0 : index
    %c0_21 = arith.constant 0 : index
    %19 = vector.load %arg2[%c3_19, %c0_20, %c0_21] : memref<5x128x32xf32, #tpu.memory_space<vmem>>, vector<1x128x32xf32>
    %20 = vector.shape_cast %19 : vector<1x128x32xf32> to vector<128x32xf32>
    %cst_22 = arith.constant dense<0.000000e+00> : vector<16x32xf32>
    %21 = tpu.matmul %18, %20, %cst_22 {dimension_numbers = #tpu.dot_dimension_numbers<[1], [0], [0], [1], [0, 0, 1, 1], [], []>} : vector<16x128xf32>, vector<128x32xf32>, vector<16x32xf32> -> vector<16x32xf32>
    %22 = arith.addf %16, %21 : vector<16x32xf32>
    %c0_23 = arith.constant 0 : index
    %c4 = arith.constant 4 : index
    %c0_24 = arith.constant 0 : index
    %23 = vector.load %arg1[%c0_23, %c4, %c0_24] : memref<1x20x128xf32, #tpu.memory_space<vmem>>, vector<1x16x128xf32>
    %24 = vector.shape_cast %23 : vector<1x16x128xf32> to vector<16x128xf32>
    %c4_25 = arith.constant 4 : index
    %c0_26 = arith.constant 0 : index
    %c0_27 = arith.constant 0 : index
    %25 = vector.load %arg2[%c4_25, %c0_26, %c0_27] : memref<5x128x32xf32, #tpu.memory_space<vmem>>, vector<1x128x32xf32>
    %26 = vector.shape_cast %25 : vector<1x128x32xf32> to vector<128x32xf32>
    %cst_28 = arith.constant dense<0.000000e+00> : vector<16x32xf32>
    %27 = tpu.matmul %24, %26, %cst_28 {dimension_numbers = #tpu.dot_dimension_numbers<[1], [0], [0], [1], [0, 0, 1, 1], [], []>} : vector<16x128xf32>, vector<128x32xf32>, vector<16x32xf32> -> vector<16x32xf32>
    %28 = arith.addf %22, %27 : vector<16x32xf32>
    %cst_29 = arith.constant 0.000000e+00 : f32
    %29 = vector.broadcast %cst_29 : f32 to vector<16x32xf32>
    %30 = arith.maximumf %28, %29 : vector<16x32xf32>
    %cst_30 = arith.constant 0.000000e+00 : f32
    %31 = vector.broadcast %cst_30 : f32 to vector<2x32xf32>
    %c0_31 = arith.constant 0 : index
    %c0_32 = arith.constant 0 : index
    %32 = vector.load %arg5[%c0_31, %c0_32] : memref<20x32xf32, #tpu.memory_space<vmem>>, vector<2x32xf32>
    tpu.vector_store %arg5[%c0_31, %c0_32], %31 {strides = array<i32>} : memref<20x32xf32, #tpu.memory_space<vmem>>, vector<2x32xf32>,
    %cst_33 = arith.constant 0.000000e+00 : f32
    %33 = vector.broadcast %cst_33 : f32 to vector<2x32xf32>
    %c18 = arith.constant 18 : index
    %c0_34 = arith.constant 0 : index
    %34 = vector.load %arg5[%c18, %c0_34] : memref<20x32xf32, #tpu.memory_space<vmem>>, vector<2x32xf32>
    tpu.vector_store %arg5[%c18, %c0_34], %33 {strides = array<i32>} : memref<20x32xf32, #tpu.memory_space<vmem>>, vector<2x32xf32>,
    %c2_35 = arith.constant 2 : index
    %c0_36 = arith.constant 0 : index
    %35 = vector.load %arg5[%c2_35, %c0_36] : memref<20x32xf32, #tpu.memory_space<vmem>>, vector<16x32xf32>
    tpu.vector_store %arg5[%c2_35, %c0_36], %30 {strides = array<i32>} : memref<20x32xf32, #tpu.memory_space<vmem>>, vector<16x32xf32>,
    %c0_37 = arith.constant 0 : index
    %c0_38 = arith.constant 0 : index
    %36 = vector.load %arg5[%c0_37, %c0_38] : memref<20x32xf32, #tpu.memory_space<vmem>>, vector<16x32xf32>
    %c0_39 = arith.constant 0 : index
    %c0_40 = arith.constant 0 : index
    %c0_41 = arith.constant 0 : index
    %37 = vector.load %arg3[%c0_39, %c0_40, %c0_41] : memref<5x32x128xf32, #tpu.memory_space<vmem>>, vector<1x32x128xf32>
    %38 = vector.shape_cast %37 : vector<1x32x128xf32> to vector<32x128xf32>
    %cst_42 = arith.constant dense<0.000000e+00> : vector<16x128xf32>
    %39 = tpu.matmul %36, %38, %cst_42 {dimension_numbers = #tpu.dot_dimension_numbers<[1], [0], [0], [1], [0, 0, 1, 1], [], []>} : vector<16x32xf32>, vector<32x128xf32>, vector<16x128xf32> -> vector<16x128xf32>
    %c1_43 = arith.constant 1 : index
    %c0_44 = arith.constant 0 : index
    %40 = vector.load %arg5[%c1_43, %c0_44] : memref<20x32xf32, #tpu.memory_space<vmem>>, vector<16x32xf32>
    %c1_45 = arith.constant 1 : index
    %c0_46 = arith.constant 0 : index
    %c0_47 = arith.constant 0 : index
    %41 = vector.load %arg3[%c1_45, %c0_46, %c0_47] : memref<5x32x128xf32, #tpu.memory_space<vmem>>, vector<1x32x128xf32>
    %42 = vector.shape_cast %41 : vector<1x32x128xf32> to vector<32x128xf32>
    %cst_48 = arith.constant dense<0.000000e+00> : vector<16x128xf32>
    %43 = tpu.matmul %40, %42, %cst_48 {dimension_numbers = #tpu.dot_dimension_numbers<[1], [0], [0], [1], [0, 0, 1, 1], [], []>} : vector<16x32xf32>, vector<32x128xf32>, vector<16x128xf32> -> vector<16x128xf32>
    %44 = arith.addf %39, %43 : vector<16x128xf32>
    %c2_49 = arith.constant 2 : index
    %c0_50 = arith.constant 0 : index
    %45 = vector.load %arg5[%c2_49, %c0_50] : memref<20x32xf32, #tpu.memory_space<vmem>>, vector<16x32xf32>
    %c2_51 = arith.constant 2 : index
    %c0_52 = arith.constant 0 : index
    %c0_53 = arith.constant 0 : index
    %46 = vector.load %arg3[%c2_51, %c0_52, %c0_53] : memref<5x32x128xf32, #tpu.memory_space<vmem>>, vector<1x32x128xf32>
    %47 = vector.shape_cast %46 : vector<1x32x128xf32> to vector<32x128xf32>
    %cst_54 = arith.constant dense<0.000000e+00> : vector<16x128xf32>
    %48 = tpu.matmul %45, %47, %cst_54 {dimension_numbers = #tpu.dot_dimension_numbers<[1], [0], [0], [1], [0, 0, 1, 1], [], []>} : vector<16x32xf32>, vector<32x128xf32>, vector<16x128xf32> -> vector<16x128xf32>
    %49 = arith.addf %44, %48 : vector<16x128xf32>
    %c3_55 = arith.constant 3 : index
    %c0_56 = arith.constant 0 : index
    %50 = vector.load %arg5[%c3_55, %c0_56] : memref<20x32xf32, #tpu.memory_space<vmem>>, vector<16x32xf32>
    %c3_57 = arith.constant 3 : index
    %c0_58 = arith.constant 0 : index
    %c0_59 = arith.constant 0 : index
    %51 = vector.load %arg3[%c3_57, %c0_58, %c0_59] : memref<5x32x128xf32, #tpu.memory_space<vmem>>, vector<1x32x128xf32>
    %52 = vector.shape_cast %51 : vector<1x32x128xf32> to vector<32x128xf32>
    %cst_60 = arith.constant dense<0.000000e+00> : vector<16x128xf32>
    %53 = tpu.matmul %50, %52, %cst_60 {dimension_numbers = #tpu.dot_dimension_numbers<[1], [0], [0], [1], [0, 0, 1, 1], [], []>} : vector<16x32xf32>, vector<32x128xf32>, vector<16x128xf32> -> vector<16x128xf32>
    %54 = arith.addf %49, %53 : vector<16x128xf32>
    %c4_61 = arith.constant 4 : index
    %c0_62 = arith.constant 0 : index
    %55 = vector.load %arg5[%c4_61, %c0_62] : memref<20x32xf32, #tpu.memory_space<vmem>>, vector<16x32xf32>
    %c4_63 = arith.constant 4 : index
    %c0_64 = arith.constant 0 : index
    %c0_65 = arith.constant 0 : index
    %56 = vector.load %arg3[%c4_63, %c0_64, %c0_65] : memref<5x32x128xf32, #tpu.memory_space<vmem>>, vector<1x32x128xf32>
    %57 = vector.shape_cast %56 : vector<1x32x128xf32> to vector<32x128xf32>
    %cst_66 = arith.constant dense<0.000000e+00> : vector<16x128xf32>
    %58 = tpu.matmul %55, %57, %cst_66 {dimension_numbers = #tpu.dot_dimension_numbers<[1], [0], [0], [1], [0, 0, 1, 1], [], []>} : vector<16x32xf32>, vector<32x128xf32>, vector<16x128xf32> -> vector<16x128xf32>
    %59 = arith.addf %54, %58 : vector<16x128xf32>
    %c0_67 = arith.constant 0 : index
    %c2_68 = arith.constant 2 : index
    %c0_69 = arith.constant 0 : index
    %60 = vector.load %arg1[%c0_67, %c2_68, %c0_69] : memref<1x20x128xf32, #tpu.memory_space<vmem>>, vector<1x16x128xf32>
    %61 = vector.shape_cast %60 : vector<1x16x128xf32> to vector<16x128xf32>
    %62 = arith.addf %59, %61 : vector<16x128xf32>
    %c0_70 = arith.constant 0 : index
    %c0_71 = arith.constant 0 : index
    %c0_72 = arith.constant 0 : index
    %63 = vector.load %arg4[%c0_70, %c0_71, %c0_72] : memref<1x16x128xf32, #tpu.memory_space<vmem>>, vector<1x16x128xf32>
    %64 = vector.shape_cast %63 : vector<1x16x128xf32> to vector<16x128xf32>
    %65 = vector.shape_cast %62 : vector<16x128xf32> to vector<1x16x128xf32>
    tpu.vector_store %arg4[%c0_70, %c0_71, %c0_72], %65 {strides = array<i32>} : memref<1x16x128xf32, #tpu.memory_space<vmem>>, vector<1x16x128xf32>,
    return
  }
  func.func @transform_0(%arg0: i32) -> (i32, i32, i32) {
    %c0_i32 = arith.constant 0 : i32
    %c0_i32_0 = arith.constant 0 : i32
    %c0_i32_1 = arith.constant 0 : i32
    return %arg0, %c0_i32, %c0_i32_0 : i32, i32, i32
  }
  func.func @transform_1(%arg0: i32) -> (i32, i32, i32) {
    %c0_i32 = arith.constant 0 : i32
    %c0_i32_0 = arith.constant 0 : i32
    %c0_i32_1 = arith.constant 0 : i32
    %c0_i32_2 = arith.constant 0 : i32
    return %c0_i32, %c0_i32_0, %c0_i32_1 : i32, i32, i32
  }
  func.func @transform_2(%arg0: i32) -> (i32, i32, i32) {
    %c0_i32 = arith.constant 0 : i32
    %c0_i32_0 = arith.constant 0 : i32
    %c0_i32_1 = arith.constant 0 : i32
    %c0_i32_2 = arith.constant 0 : i32
    return %c0_i32, %c0_i32_0, %c0_i32_1 : i32, i32, i32
  }
  func.func @transform_3(%arg0: i32) -> (i32, i32, i32) {
    %c0_i32 = arith.constant 0 : i32
    %c0_i32_0 = arith.constant 0 : i32
    %c0_i32_1 = arith.constant 0 : i32
    return %arg0, %c0_i32, %c0_i32_0 : i32, i32, i32
  }
}

</mosaic_0001>

<llo_original>
// kernel: tpu_custom_call.1
$region0: #{tpu_custom_call.1}
  #allocation0 [shape = 'u32[]', space=smem, size = 0x4, offset = 0x4, fixed_abs, tag = 'smem constant byte address 0x4 - core index']
  #allocation1 [shape = 'u32[144,128]{1,0:T(1,128)}', space=vmem, size = 0x12000, scoped, tag = 'internal scratch']
  #allocation2 [shape = 'f32[20,32]{1,0:T(8,128)}', space=vmem, size = 0x3000, scoped, tag = 'scratch operand']
  %s0 = inlined_call_operand.vmem [shape: f32[2,20,128], index: 0, kind: input, shape index: {}]
  %s1 = inlined_call_operand.vmem [shape: f32[5,128,32], index: 1, kind: input, shape index: {}]
  %s2 = inlined_call_operand.vmem [shape: f32[5,32,128], index: 2, kind: input, shape index: {}]
  %s3 = inlined_call_operand.hbm [shape: f32[2,16,128], index: 3, kind: output, shape index: {}]
  %s4 = sld [smem:[#allocation0]]
  $region45: #{tpu_custom_call.1} parent=0
    _
  %s6 = ssub.s32 1, %s4
  %s7 = scalar_select 0, %s6, %s4
  $region1: #{tpu_custom_call.1} parent=0
    #allocation3 [shape = 'u8[16384]{0}', space=vmem, size = 0x4000, scoped, tag = 'output window, operand 0']
    #allocation4 [shape = 's32[2]{0}', space=sflag, size = 0x8, scoped, tag = 'scoped memory for tpu_custom_call.1']
    %8 = vsyncpa [#allocation4], 0
    %s9 = scalar_lea.sflag [#allocation4], 1
    %10 = vsyncpa %s9, 0
    loop: start=0, step=1, limit=4
    $region2: #{tpu_custom_call.1} parent=1 // loop_pre_header
      _
    $region3: #{tpu_custom_call.1} parent=1 // loop_header
      %s12 = sphi 0, %s16
      %p13 = scmp.ge.s32.totalorder %s12, 4
      %s22 = sphi 0, %s24
      %s25 = sphi 0, %s22
      %s26 = sphi 0, %s25
      %s42 = sphi 0, %s26
      %s46 = sphi 0, %s46
      %s48 = sphi 0, %s46
      %s49 = sphi 0, %s48
      %s63 = sphi 0, %s49
      %s67 = sphi 0, %s67
      %s69 = sphi 0, %s67
      %s70 = sphi 0, %s69
      %s84 = sphi 0, %s70
      %s90 = sphi 0, %s92
      %s93 = sphi 0, %s90
      %s94 = sphi 0, %s93
      %s110 = sphi 0, %s94
    $region4: #{tpu_custom_call.1} parent=1 // loop_header_branch
      %15 = sbr.rel (%p13) target = $region8
    $region5: #{tpu_custom_call.1} parent=1 // loop_body
      %s17 = ssub.s32 %s12, 1
      %s18 = ssub.s32 %s12, 2
      %s19 = sadd.s32 %s12, 1
      %s20 = ssub.s32 %s12, %s19
      %p21 = scmp.eq.s32.totalorder %s20, 0
      %s23 = sadd.s32 %s22, 1
      %s24 = scalar_select %p21, %s22, %s23
      %p27 = pneg %p21
      %p28 = scmp.eq.s32.totalorder %s12, 1
      %p29 = por %p27, %p28
      %p30 = scmp.ne.s32.totalorder %s22, %s25
      %p31 = scmp.eq.s32.totalorder %s12, 0
      %p32 = por %p30, %p31
      %p33 = scmp.ne.s32.totalorder %s22, %s25
      %p34 = scmp.eq.s32.totalorder %s17, 1
      %p35 = por %p33, %p34
      %p36 = scmp.ne.s32.totalorder %s25, %s26
      %p37 = scmp.eq.s32.totalorder %s17, 0
      %p38 = por %p36, %p37
      %p39 = scmp.ne.s32.totalorder %s25, %s26
      %p40 = scmp.eq.s32.totalorder %s18, 1
      %p41 = por %p39, %p40
      %p43 = scmp.ne.s32.totalorder %s26, %s42
      %p44 = scmp.eq.s32.totalorder %s18, 0
      %p45 = por %p43, %p44
      %s47 = sadd.s32 %s46, 1
      %p50 = scmp.eq.s32.totalorder %s12, 1
      %p51 = scmp.ne.s32.totalorder %s46, %s48
      %p52 = scmp.eq.s32.totalorder %s12, 0
      %p53 = por %p51, %p52
      %p54 = scmp.ne.s32.totalorder %s46, %s48
      %p55 = scmp.eq.s32.totalorder %s17, 1
      %p56 = por %p54, %p55
      %p57 = scmp.ne.s32.totalorder %s48, %s49
      %p58 = scmp.eq.s32.totalorder %s17, 0
      %p59 = por %p57, %p58
      %p60 = scmp.ne.s32.totalorder %s48, %s49
      %p61 = scmp.eq.s32.totalorder %s18, 1
      %p62 = por %p60, %p61
      %p64 = scmp.ne.s32.totalorder %s49, %s63
      %p65 = scmp.eq.s32.totalorder %s18, 0
      %p66 = por %p64, %p65
      %s68 = sadd.s32 %s67, 1
      %p71 = scmp.eq.s32.totalorder %s12, 1
      %p72 = scmp.ne.s32.totalorder %s67, %s69
      %p73 = scmp.eq.s32.totalorder %s12, 0
      %p74 = por %p72, %p73
      %p75 = scmp.ne.s32.totalorder %s67, %s69
      %p76 = scmp.eq.s32.totalorder %s17, 1
      %p77 = por %p75, %p76
      %p78 = scmp.ne.s32.totalorder %s69, %s70
      %p79 = scmp.eq.s32.totalorder %s17, 0
      %p80 = por %p78, %p79
      %p81 = scmp.ne.s32.totalorder %s69, %s70
      %p82 = scmp.eq.s32.totalorder %s18, 1
      %p83 = por %p81, %p82
      %p85 = scmp.ne.s32.totalorder %s70, %s84
      %p86 = scmp.eq.s32.totalorder %s18, 0
      %p87 = por %p85, %p86
      %s88 = ssub.s32 %s12, %s19
      %p89 = scmp.eq.s32.totalorder %s88, 0
      %s91 = sadd.s32 %s90, 1
      %s92 = scalar_select %p89, %s90, %s91
      %p95 = pneg %p89
      %p96 = scmp.eq.s32.totalorder %s12, 1
      %p97 = por %p95, %p96
      %p98 = scmp.ne.s32.totalorder %s90, %s93
      %p99 = scmp.eq.s32.totalorder %s12, 0
      %p100 = por %p98, %p99
      %p101 = scmp.ne.s32.totalorder %s90, %s93
      %p102 = scmp.eq.s32.totalorder %s17, 1
      %p103 = por %p101, %p102
      %p104 = scmp.ne.s32.totalorder %s93, %s94
      %p105 = scmp.eq.s32.totalorder %s17, 0
      %p106 = por %p104, %p105
      %p107 = scmp.ne.s32.totalorder %s93, %s94
      %p108 = scmp.eq.s32.totalorder %s18, 1
      %p109 = por %p107, %p108
      %p111 = scmp.ne.s32.totalorder %s94, %s110
      %p112 = scmp.eq.s32.totalorder %s18, 0
      %p113 = por %p111, %p112
      %p114 = scmp.le.s32.totalorder 1, %s12
      %p115 = scmp.lt.s32.totalorder %s12, 3
      %p116 = pnand %p114, %p115
      %p117 = pneg %p116
      // Predicated region
      $region9: #{tpu_custom_call.1} parent=5 // pred_check
        _
      $region10: #{tpu_custom_call.1} parent=5 // pred_check_branch
        %119 = sbr.rel (%p116) target = $region12
      $region11: #{tpu_custom_call.1} parent=5 // pred_region
        %s120 = ssub.s32 %s12, 1
        // Predicated region
        $region13: #{tpu_custom_call.1} parent=11 // pred_check
          %p121 = pneg %p59
        $region14: #{tpu_custom_call.1} parent=11 // pred_check_branch
          %123 = sbr.rel (%p121) target = $region16
        $region15: #{tpu_custom_call.1} parent=11 // pred_region
          _
        $region16: #{tpu_custom_call.1} parent=11 // pred_fallthru
          _
        // Predicated region
        $region17: #{tpu_custom_call.1} parent=11 // pred_check
          %p124 = pneg %p80
        $region18: #{tpu_custom_call.1} parent=11 // pred_check_branch
          %126 = sbr.rel (%p124) target = $region20
        $region19: #{tpu_custom_call.1} parent=11 // pred_region
          _
        $region20: #{tpu_custom_call.1} parent=11 // pred_fallthru
          _
      $region12: #{tpu_custom_call.1} parent=5 // pred_fallthru
        _
      %p127 = scmp.lt.s32.totalorder %s12, 2
      // Predicated region
      $region21: #{tpu_custom_call.1} parent=5 // pred_check
        %p128 = pneg %p127
      $region22: #{tpu_custom_call.1} parent=5 // pred_check_branch
        %130 = sbr.rel (%p128) target = $region24
      $region23: #{tpu_custom_call.1} parent=5 // pred_region
        // Predicated region
        $region25: #{tpu_custom_call.1} parent=23 // pred_check
          %p131 = pneg %p32
        $region26: #{tpu_custom_call.1} parent=23 // pred_check_branch
          %133 = sbr.rel (%p131) target = $region28
        $region27: #{tpu_custom_call.1} parent=23 // pred_region
          %p134 = scmp.lt.s32.totalorder %s12, 1
          %s135 = scalar_select %p134, %s12, 1
          %s136 = smul.addr %s135, 3
          %s137 = smul.addr %s136, 8
          %s138 = scalar_lea.vmem %s0, %s137
        $region28: #{tpu_custom_call.1} parent=23 // pred_fallthru
          _
      $region24: #{tpu_custom_call.1} parent=5 // pred_fallthru
        _
      %p139 = scmp.le.s32.totalorder 1, %s12
      %p140 = scmp.lt.s32.totalorder %s12, 3
      %p141 = pnand %p139, %p140
      %p142 = pneg %p141
      // Predicated region
      $region29: #{tpu_custom_call.1} parent=5 // pred_check
        _
      $region30: #{tpu_custom_call.1} parent=5 // pred_check_branch
        %144 = sbr.rel (%p141) target = $region32
      $region31: #{tpu_custom_call.1} parent=5 // pred_region
        %s145 = ssub.s32 %s12, 1
        %p146 = scmp.lt.s32.totalorder %s17, 1
        %s147 = scalar_select %p146, %s17, 1
        %s148 = smul.addr %s147, 3
        %s149 = smul.addr %s148, 8
        %s150 = scalar_lea.vmem %s0, %s149
        %p151 = pneg %p38
        %p152 = pneg %p35
        %p153 = pneg %p59
        %p154 = pneg %p56
        %p155 = pneg %p80
        %p156 = pneg %p77
        %p157 = pneg %p106
        %p158 = pneg %p103
        %s159 = sand.u32 %s93, 1
        %s160 = scalar_lea.sflag [#allocation4], %s159
        %s161 = sand.u32 %s93, 1
        %s162 = smul.addr %s161, 16
        %s163 = scalar_lea.vmem [#allocation3], %s162
        %p164 = scmp.lt.s32.totalorder %s17, 1
        %s165 = scalar_select %p164, %s17, 1
        %s166 = smul.addr %s165, 3
        %s167 = smul.addr %s166, 8
        %s168 = scalar_lea.vmem %s0, %s167
        %v169 = vld [vmem:[%s168] sm:$0xff]
        %v170 = vld [vmem:[%s168 + $0x8] sm:$0xff]
        %v171 = vld [vmem:[%s1] sm:$0xff]
        %v172 = vld [vmem:[%s1 + $0x8] sm:$0xff]
        %v173 = vld [vmem:[%s1 + $0x10] sm:$0xff]
        %v174 = vld [vmem:[%s1 + $0x18] sm:$0xff]
        %v175 = vld [vmem:[%s1 + $0x20] sm:$0xff]
        %v176 = vld [vmem:[%s1 + $0x28] sm:$0xff]
        %v177 = vld [vmem:[%s1 + $0x30] sm:$0xff]
        %v178 = vld [vmem:[%s1 + $0x38] sm:$0xff]
        %v179 = vld [vmem:[%s1 + $0x40] sm:$0xff]
        %v180 = vld [vmem:[%s1 + $0x48] sm:$0xff]
        %v181 = vld [vmem:[%s1 + $0x50] sm:$0xff]
        %v182 = vld [vmem:[%s1 + $0x58] sm:$0xff]
        %v183 = vld [vmem:[%s1 + $0x60] sm:$0xff]
        %v184 = vld [vmem:[%s1 + $0x68] sm:$0xff]
        %v185 = vld [vmem:[%s1 + $0x70] sm:$0xff]
        %v186 = vld [vmem:[%s1 + $0x78] sm:$0xff]
        %v187 = vld [vmem:[%s168 + $0x1] sm:$0xff]
        %v188 = vld [vmem:[%s168 + $0x9] sm:$0xff]
        %s189 = scalar_lea.vmem %s1, 128
        %v190 = vld [vmem:[%s189] sm:$0xff]
        %v191 = vld [vmem:[%s189 + $0x8] sm:$0xff]
        %v192 = vld [vmem:[%s189 + $0x10] sm:$0xff]
        %v193 = vld [vmem:[%s189 + $0x18] sm:$0xff]
        %v194 = vld [vmem:[%s189 + $0x20] sm:$0xff]
        %v195 = vld [vmem:[%s189 + $0x28] sm:$0xff]
        %v196 = vld [vmem:[%s189 + $0x30] sm:$0xff]
        %v197 = vld [vmem:[%s189 + $0x38] sm:$0xff]
        %v198 = vld [vmem:[%s189 + $0x40] sm:$0xff]
        %v199 = vld [vmem:[%s189 + $0x48] sm:$0xff]
        %v200 = vld [vmem:[%s189 + $0x50] sm:$0xff]
        %v201 = vld [vmem:[%s189 + $0x58] sm:$0xff]
        %v202 = vld [vmem:[%s189 + $0x60] sm:$0xff]
        %v203 = vld [vmem:[%s189 + $0x68] sm:$0xff]
        %v204 = vld [vmem:[%s189 + $0x70] sm:$0xff]
        %v205 = vld [vmem:[%s189 + $0x78] sm:$0xff]
        %206 = vmatprep.subr.mxu0 0.0
        %207 = vmatpush1.msra.mxu0 %v190
        %208 = vmatprep.subr.mxu0 0.0
        %209 = vmatpush1.msra.mxu0 %v191
        %210 = vmatprep.subr.mxu0 0.0
        %211 = vmatpush1.msra.mxu0 %v192
        %212 = vmatprep.subr.mxu0 0.0
        %213 = vmatpush1.msra.mxu0 %v193
        %214 = vmatprep.subr.mxu0 0.0
        %215 = vmatpush1.msra.mxu0 %v194
        %216 = vmatprep.subr.mxu0 0.0
        %217 = vmatpush1.msra.mxu0 %v195
        %218 = vmatprep.subr.mxu0 0.0
        %219 = vmatpush1.msra.mxu0 %v196
        %220 = vmatprep.subr.mxu0 0.0
        %221 = vmatpush1.msra.mxu0 %v197
        %222 = vmatprep.subr.mxu0 0.0
        %223 = vmatpush1.msra.mxu0 %v198
        %224 = vmatprep.subr.mxu0 0.0
        %225 = vmatpush1.msra.mxu0 %v199
        %226 = vmatprep.subr.mxu0 0.0
        %227 = vmatpush1.msra.mxu0 %v200
        %228 = vmatprep.subr.mxu0 0.0
        %229 = vmatpush1.msra.mxu0 %v201
        %230 = vmatprep.subr.mxu0 0.0
        %231 = vmatpush1.msra.mxu0 %v202
        %232 = vmatprep.subr.mxu0 0.0
        %233 = vmatpush1.msra.mxu0 %v203
        %234 = vmatprep.subr.mxu0 0.0
        %235 = vmatpush1.msra.mxu0 %v204
        %236 = vmatprep.subr.mxu0 0.0
        %237 = vmatpush1.msra.mxu0 %v205
        %238 = vmatprep.subr.mxu0 0.0
        %239 = vmatpush1.msra.mxu0 0.0
        %240 = vmatprep.subr.mxu0 0.0
        %241 = vmatpush1.msra.mxu0 0.0
        %242 = vmatprep.subr.mxu0 0.0
        %243 = vmatpush1.msra.mxu0 0.0
        %244 = vmatprep.subr.mxu0 0.0
        %245 = vmatpush1.msra.mxu0 0.0
        %246 = vmatprep.subr.mxu0 0.0
        %247 = vmatpush1.msra.mxu0 0.0
        %248 = vmatprep.subr.mxu0 0.0
        %249 = vmatpush1.msra.mxu0 0.0
        %250 = vmatprep.subr.mxu0 0.0
        %251 = vmatpush1.msra.mxu0 0.0
        %252 = vmatprep.subr.mxu0 0.0
        %253 = vmatpush1.msra.mxu0 0.0
        %254 = vmatprep.subr.mxu0 0.0
        %255 = vmatpush1.msra.mxu0 0.0
        %256 = vmatprep.subr.mxu0 0.0
        %257 = vmatpush1.msra.mxu0 0.0
        %258 = vmatprep.subr.mxu0 0.0
        %259 = vmatpush1.msra.mxu0 0.0
        %260 = vmatprep.subr.mxu0 0.0
        %261 = vmatpush1.msra.mxu0 0.0
        %262 = vmatprep.subr.mxu0 0.0
        %263 = vmatpush1.msra.mxu0 0.0
        %264 = vmatprep.subr.mxu0 0.0
        %265 = vmatpush1.msra.mxu0 0.0
        %266 = vmatprep.subr.mxu0 0.0
        %267 = vmatpush1.msra.mxu0 0.0
        %268 = vmatprep.subr.mxu0 0.0
        %269 = vmatpush1.msra.mxu0 0.0
        %270 = vmatprep.mubr.f32.mxu0 0.0
        %271 = vmatmul.mubr.f32.gmra.mrb[0].mxu0 %v187
        %v272 = vpop.f32.mrb[0].mxu0
        %v273 = vadd.f32 0.0, %v272
        %v274 = vpop.f32.mrb[0].mxu0
        %275 = vmatprep.mubr.f32.mxu0 0.0
        %276 = vmatmul.mubr.f32.gmra.mrb[0].mxu0 %v188
        %v277 = vpop.f32.mrb[0].mxu0
        %v278 = vadd.f32 0.0, %v277
        %v279 = vpop.f32.mrb[0].mxu0
        %280 = vdwg.mxu0
        %281 = vmatprep.subr.mxu0 0.0
        %282 = vmatpush1.msra.mxu0 %v171
        %283 = vmatprep.subr.mxu0 0.0
        %284 = vmatpush1.msra.mxu0 %v172
        %285 = vmatprep.subr.mxu0 0.0
        %286 = vmatpush1.msra.mxu0 %v173
        %287 = vmatprep.subr.mxu0 0.0
        %288 = vmatpush1.msra.mxu0 %v174
        %289 = vmatprep.subr.mxu0 0.0
        %290 = vmatpush1.msra.mxu0 %v175
        %291 = vmatprep.subr.mxu0 0.0
        %292 = vmatpush1.msra.mxu0 %v176
        %293 = vmatprep.subr.mxu0 0.0
        %294 = vmatpush1.msra.mxu0 %v177
        %295 = vmatprep.subr.mxu0 0.0
        %296 = vmatpush1.msra.mxu0 %v178
        %297 = vmatprep.subr.mxu0 0.0
        %298 = vmatpush1.msra.mxu0 %v179
        %299 = vmatprep.subr.mxu0 0.0
        %300 = vmatpush1.msra.mxu0 %v180
        %301 = vmatprep.subr.mxu0 0.0
        %302 = vmatpush1.msra.mxu0 %v181
        %303 = vmatprep.subr.mxu0 0.0
        %304 = vmatpush1.msra.mxu0 %v182
        %305 = vmatprep.subr.mxu0 0.0
        %306 = vmatpush1.msra.mxu0 %v183
        %307 = vmatprep.subr.mxu0 0.0
        %308 = vmatpush1.msra.mxu0 %v184
        %309 = vmatprep.subr.mxu0 0.0
        %310 = vmatpush1.msra.mxu0 %v185
        %311 = vmatprep.subr.mxu0 0.0
        %312 = vmatpush1.msra.mxu0 %v186
        %313 = vmatprep.subr.mxu0 0.0
        %314 = vmatpush1.msra.mxu0 0.0
        %315 = vmatprep.subr.mxu0 0.0
        %316 = vmatpush1.msra.mxu0 0.0
        %317 = vmatprep.subr.mxu0 0.0
        %318 = vmatpush1.msra.mxu0 0.0
        %319 = vmatprep.subr.mxu0 0.0
        %320 = vmatpush1.msra.mxu0 0.0
        %321 = vmatprep.subr.mxu0 0.0
        %322 = vmatpush1.msra.mxu0 0.0
        %323 = vmatprep.subr.mxu0 0.0
        %324 = vmatpush1.msra.mxu0 0.0
        %325 = vmatprep.subr.mxu0 0.0
        %326 = vmatpush1.msra.mxu0 0.0
        %327 = vmatprep.subr.mxu0 0.0
        %328 = vmatpush1.msra.mxu0 0.0
        %329 = vmatprep.subr.mxu0 0.0
        %330 = vmatpush1.msra.mxu0 0.0
        %331 = vmatprep.subr.mxu0 0.0
        %332 = vmatpush1.msra.mxu0 0.0
        %333 = vmatprep.subr.mxu0 0.0
        %334 = vmatpush1.msra.mxu0 0.0
        %335 = vmatprep.subr.mxu0 0.0
        %336 = vmatpush1.msra.mxu0 0.0
        %337 = vmatprep.subr.mxu0 0.0
        %338 = vmatpush1.msra.mxu0 0.0
        %339 = vmatprep.subr.mxu0 0.0
        %340 = vmatpush1.msra.mxu0 0.0
        %341 = vmatprep.subr.mxu0 0.0
        %342 = vmatpush1.msra.mxu0 0.0
        %343 = vmatprep.subr.mxu0 0.0
        %344 = vmatpush1.msra.mxu0 0.0
        %345 = vmatprep.mubr.f32.mxu0 0.0
        %346 = vmatmul.mubr.f32.gmra.mrb[0].mxu0 %v169
        %v347 = vpop.f32.mrb[0].mxu0
        %v348 = vadd.f32 %v273, %v347
        %v349 = vpop.f32.mrb[0].mxu0
        %350 = vmatprep.mubr.f32.mxu0 0.0
        %351 = vmatmul.mubr.f32.gmra.mrb[0].mxu0 %v170
        %v352 = vpop.f32.mrb[0].mxu0
        %v353 = vadd.f32 %v278, %v352
        %v354 = vpop.f32.mrb[0].mxu0
        %355 = vdwg.mxu0
        %v356 = vld [vmem:[%s168 + $0x2] sm:$0xff]
        %v357 = vld [vmem:[%s168 + $0xa] sm:$0xff]
        %s358 = scalar_lea.vmem %s1, 256
        %v359 = vld [vmem:[%s358] sm:$0xff]
        %v360 = vld [vmem:[%s358 + $0x8] sm:$0xff]
        %v361 = vld [vmem:[%s358 + $0x10] sm:$0xff]
        %v362 = vld [vmem:[%s358 + $0x18] sm:$0xff]
        %v363 = vld [vmem:[%s358 + $0x20] sm:$0xff]
        %v364 = vld [vmem:[%s358 + $0x28] sm:$0xff]
        %v365 = vld [vmem:[%s358 + $0x30] sm:$0xff]
        %v366 = vld [vmem:[%s358 + $0x38] sm:$0xff]
        %v367 = vld [vmem:[%s358 + $0x40] sm:$0xff]
        %v368 = vld [vmem:[%s358 + $0x48] sm:$0xff]
        %v369 = vld [vmem:[%s358 + $0x50] sm:$0xff]
        %v370 = vld [vmem:[%s358 + $0x58] sm:$0xff]
        %v371 = vld [vmem:[%s358 + $0x60] sm:$0xff]
        %v372 = vld [vmem:[%s358 + $0x68] sm:$0xff]
        %v373 = vld [vmem:[%s358 + $0x70] sm:$0xff]
        %v374 = vld [vmem:[%s358 + $0x78] sm:$0xff]
        %375 = vmatprep.subr.mxu0 0.0
        %376 = vmatpush1.msra.mxu0 %v359
        %377 = vmatprep.subr.mxu0 0.0
        %378 = vmatpush1.msra.mxu0 %v360
        %379 = vmatprep.subr.mxu0 0.0
        %380 = vmatpush1.msra.mxu0 %v361
        %381 = vmatprep.subr.mxu0 0.0
        %382 = vmatpush1.msra.mxu0 %v362
        %383 = vmatprep.subr.mxu0 0.0
        %384 = vmatpush1.msra.mxu0 %v363
        %385 = vmatprep.subr.mxu0 0.0
        %386 = vmatpush1.msra.mxu0 %v364
        %387 = vmatprep.subr.mxu0 0.0
        %388 = vmatpush1.msra.mxu0 %v365
        %389 = vmatprep.subr.mxu0 0.0
        %390 = vmatpush1.msra.mxu0 %v366
        %391 = vmatprep.subr.mxu0 0.0
        %392 = vmatpush1.msra.mxu0 %v367
        %393 = vmatprep.subr.mxu0 0.0
        %394 = vmatpush1.msra.mxu0 %v368
        %395 = vmatprep.subr.mxu0 0.0
        %396 = vmatpush1.msra.mxu0 %v369
        %397 = vmatprep.subr.mxu0 0.0
        %398 = vmatpush1.msra.mxu0 %v370
        %399 = vmatprep.subr.mxu0 0.0
        %400 = vmatpush1.msra.mxu0 %v371
        %401 = vmatprep.subr.mxu0 0.0
        %402 = vmatpush1.msra.mxu0 %v372
        %403 = vmatprep.subr.mxu0 0.0
        %404 = vmatpush1.msra.mxu0 %v373
        %405 = vmatprep.subr.mxu0 0.0
        %406 = vmatpush1.msra.mxu0 %v374
        %407 = vmatprep.subr.mxu0 0.0
        %408 = vmatpush1.msra.mxu0 0.0
        %409 = vmatprep.subr.mxu0 0.0
        %410 = vmatpush1.msra.mxu0 0.0
        %411 = vmatprep.subr.mxu0 0.0
        %412 = vmatpush1.msra.mxu0 0.0
        %413 = vmatprep.subr.mxu0 0.0
        %414 = vmatpush1.msra.mxu0 0.0
        %415 = vmatprep.subr.mxu0 0.0
        %416 = vmatpush1.msra.mxu0 0.0
        %417 = vmatprep.subr.mxu0 0.0
        %418 = vmatpush1.msra.mxu0 0.0
        %419 = vmatprep.subr.mxu0 0.0
        %420 = vmatpush1.msra.mxu0 0.0
        %421 = vmatprep.subr.mxu0 0.0
        %422 = vmatpush1.msra.mxu0 0.0
        %423 = vmatprep.subr.mxu0 0.0
        %424 = vmatpush1.msra.mxu0 0.0
        %425 = vmatprep.subr.mxu0 0.0
        %426 = vmatpush1.msra.mxu0 0.0
        %427 = vmatprep.subr.mxu0 0.0
        %428 = vmatpush1.msra.mxu0 0.0
        %429 = vmatprep.subr.mxu0 0.0
        %430 = vmatpush1.msra.mxu0 0.0
        %431 = vmatprep.subr.mxu0 0.0
        %432 = vmatpush1.msra.mxu0 0.0
        %433 = vmatprep.subr.mxu0 0.0
        %434 = vmatpush1.msra.mxu0 0.0
        %435 = vmatprep.subr.mxu0 0.0
        %436 = vmatpush1.msra.mxu0 0.0
        %437 = vmatprep.subr.mxu0 0.0
        %438 = vmatpush1.msra.mxu0 0.0
        %439 = vmatprep.mubr.f32.mxu0 0.0
        %440 = vmatmul.mubr.f32.gmra.mrb[0].mxu0 %v356
        %v441 = vpop.f32.mrb[0].mxu0
        %v442 = vadd.f32 0.0, %v441
        %v443 = vpop.f32.mrb[0].mxu0
        %444 = vmatprep.mubr.f32.mxu0 0.0
        %445 = vmatmul.mubr.f32.gmra.mrb[0].mxu0 %v357
        %v446 = vpop.f32.mrb[0].mxu0
        %v447 = vadd.f32 0.0, %v446
        %v448 = vpop.f32.mrb[0].mxu0
        %449 = vdwg.mxu0
        %v450 = vadd.f32 %v348, %v442
        %v451 = vadd.f32 %v353, %v447
        %v452 = vld [vmem:[%s168 + $0x3] sm:$0xff]
        %v453 = vld [vmem:[%s168 + $0xb] sm:$0xff]
        %s454 = scalar_lea.vmem %s1, 384
        %v455 = vld [vmem:[%s454] sm:$0xff]
        %v456 = vld [vmem:[%s454 + $0x8] sm:$0xff]
        %v457 = vld [vmem:[%s454 + $0x10] sm:$0xff]
        %v458 = vld [vmem:[%s454 + $0x18] sm:$0xff]
        %v459 = vld [vmem:[%s454 + $0x20] sm:$0xff]
        %v460 = vld [vmem:[%s454 + $0x28] sm:$0xff]
        %v461 = vld [vmem:[%s454 + $0x30] sm:$0xff]
        %v462 = vld [vmem:[%s454 + $0x38] sm:$0xff]
        %v463 = vld [vmem:[%s454 + $0x40] sm:$0xff]
        %v464 = vld [vmem:[%s454 + $0x48] sm:$0xff]
        %v465 = vld [vmem:[%s454 + $0x50] sm:$0xff]
        %v466 = vld [vmem:[%s454 + $0x58] sm:$0xff]
        %v467 = vld [vmem:[%s454 + $0x60] sm:$0xff]
        %v468 = vld [vmem:[%s454 + $0x68] sm:$0xff]
        %v469 = vld [vmem:[%s454 + $0x70] sm:$0xff]
        %v470 = vld [vmem:[%s454 + $0x78] sm:$0xff]
        %471 = vmatprep.subr.mxu0 0.0
        %472 = vmatpush1.msra.mxu0 %v455
        %473 = vmatprep.subr.mxu0 0.0
        %474 = vmatpush1.msra.mxu0 %v456
        %475 = vmatprep.subr.mxu0 0.0
        %476 = vmatpush1.msra.mxu0 %v457
        %477 = vmatprep.subr.mxu0 0.0
        %478 = vmatpush1.msra.mxu0 %v458
        %479 = vmatprep.subr.mxu0 0.0
        %480 = vmatpush1.msra.mxu0 %v459
        %481 = vmatprep.subr.mxu0 0.0
        %482 = vmatpush1.msra.mxu0 %v460
        %483 = vmatprep.subr.mxu0 0.0
        %484 = vmatpush1.msra.mxu0 %v461
        %485 = vmatprep.subr.mxu0 0.0
        %486 = vmatpush1.msra.mxu0 %v462
        %487 = vmatprep.subr.mxu0 0.0
        %488 = vmatpush1.msra.mxu0 %v463
        %489 = vmatprep.subr.mxu0 0.0
        %490 = vmatpush1.msra.mxu0 %v464
        %491 = vmatprep.subr.mxu0 0.0
        %492 = vmatpush1.msra.mxu0 %v465
        %493 = vmatprep.subr.mxu0 0.0
        %494 = vmatpush1.msra.mxu0 %v466
        %495 = vmatprep.subr.mxu0 0.0
        %496 = vmatpush1.msra.mxu0 %v467
        %497 = vmatprep.subr.mxu0 0.0
        %498 = vmatpush1.msra.mxu0 %v468
        %499 = vmatprep.subr.mxu0 0.0
        %500 = vmatpush1.msra.mxu0 %v469
        %501 = vmatprep.subr.mxu0 0.0
        %502 = vmatpush1.msra.mxu0 %v470
        %503 = vmatprep.subr.mxu0 0.0
        %504 = vmatpush1.msra.mxu0 0.0
        %505 = vmatprep.subr.mxu0 0.0
        %506 = vmatpush1.msra.mxu0 0.0
        %507 = vmatprep.subr.mxu0 0.0
        %508 = vmatpush1.msra.mxu0 0.0
        %509 = vmatprep.subr.mxu0 0.0
        %510 = vmatpush1.msra.mxu0 0.0
        %511 = vmatprep.subr.mxu0 0.0
        %512 = vmatpush1.msra.mxu0 0.0
        %513 = vmatprep.subr.mxu0 0.0
        %514 = vmatpush1.msra.mxu0 0.0
        %515 = vmatprep.subr.mxu0 0.0
        %516 = vmatpush1.msra.mxu0 0.0
        %517 = vmatprep.subr.mxu0 0.0
        %518 = vmatpush1.msra.mxu0 0.0
        %519 = vmatprep.subr.mxu0 0.0
        %520 = vmatpush1.msra.mxu0 0.0
        %521 = vmatprep.subr.mxu0 0.0
        %522 = vmatpush1.msra.mxu0 0.0
        %523 = vmatprep.subr.mxu0 0.0
        %524 = vmatpush1.msra.mxu0 0.0
        %525 = vmatprep.subr.mxu0 0.0
        %526 = vmatpush1.msra.mxu0 0.0
        %527 = vmatprep.subr.mxu0 0.0
        %528 = vmatpush1.msra.mxu0 0.0
        %529 = vmatprep.subr.mxu0 0.0
        %530 = vmatpush1.msra.mxu0 0.0
        %531 = vmatprep.subr.mxu0 0.0
        %532 = vmatpush1.msra.mxu0 0.0
        %533 = vmatprep.subr.mxu0 0.0
        %534 = vmatpush1.msra.mxu0 0.0
        %535 = vmatprep.mubr.f32.mxu0 0.0
        %536 = vmatmul.mubr.f32.gmra.mrb[0].mxu0 %v452
        %v537 = vpop.f32.mrb[0].mxu0
        %v538 = vadd.f32 0.0, %v537
        %v539 = vpop.f32.mrb[0].mxu0
        %540 = vmatprep.mubr.f32.mxu0 0.0
        %541 = vmatmul.mubr.f32.gmra.mrb[0].mxu0 %v453
        %v542 = vpop.f32.mrb[0].mxu0
        %v543 = vadd.f32 0.0, %v542
        %v544 = vpop.f32.mrb[0].mxu0
        %545 = vdwg.mxu0
        %v546 = vadd.f32 %v450, %v538
        %v547 = vadd.f32 %v451, %v543
        %v548 = vld [vmem:[%s168 + $0x4] sm:$0xff]
        %v549 = vld [vmem:[%s168 + $0xc] sm:$0xff]
        %s550 = scalar_lea.vmem %s1, 512
        %v551 = vld [vmem:[%s550] sm:$0xff]
        %v552 = vld [vmem:[%s550 + $0x8] sm:$0xff]
        %v553 = vld [vmem:[%s550 + $0x10] sm:$0xff]
        %v554 = vld [vmem:[%s550 + $0x18] sm:$0xff]
        %v555 = vld [vmem:[%s550 + $0x20] sm:$0xff]
        %v556 = vld [vmem:[%s550 + $0x28] sm:$0xff]
        %v557 = vld [vmem:[%s550 + $0x30] sm:$0xff]
        %v558 = vld [vmem:[%s550 + $0x38] sm:$0xff]
        %v559 = vld [vmem:[%s550 + $0x40] sm:$0xff]
        %v560 = vld [vmem:[%s550 + $0x48] sm:$0xff]
        %v561 = vld [vmem:[%s550 + $0x50] sm:$0xff]
        %v562 = vld [vmem:[%s550 + $0x58] sm:$0xff]
        %v563 = vld [vmem:[%s550 + $0x60] sm:$0xff]
        %v564 = vld [vmem:[%s550 + $0x68] sm:$0xff]
        %v565 = vld [vmem:[%s550 + $0x70] sm:$0xff]
        %v566 = vld [vmem:[%s550 + $0x78] sm:$0xff]
        %567 = vmatprep.subr.mxu0 0.0
        %568 = vmatpush1.msra.mxu0 %v551
        %569 = vmatprep.subr.mxu0 0.0
        %570 = vmatpush1.msra.mxu0 %v552
        %571 = vmatprep.subr.mxu0 0.0
        %572 = vmatpush1.msra.mxu0 %v553
        %573 = vmatprep.subr.mxu0 0.0
        %574 = vmatpush1.msra.mxu0 %v554
        %575 = vmatprep.subr.mxu0 0.0
        %576 = vmatpush1.msra.mxu0 %v555
        %577 = vmatprep.subr.mxu0 0.0
        %578 = vmatpush1.msra.mxu0 %v556
        %579 = vmatprep.subr.mxu0 0.0
        %580 = vmatpush1.msra.mxu0 %v557
        %581 = vmatprep.subr.mxu0 0.0
        %582 = vmatpush1.msra.mxu0 %v558
        %583 = vmatprep.subr.mxu0 0.0
        %584 = vmatpush1.msra.mxu0 %v559
        %585 = vmatprep.subr.mxu0 0.0
        %586 = vmatpush1.msra.mxu0 %v560
        %587 = vmatprep.subr.mxu0 0.0
        %588 = vmatpush1.msra.mxu0 %v561
        %589 = vmatprep.subr.mxu0 0.0
        %590 = vmatpush1.msra.mxu0 %v562
        %591 = vmatprep.subr.mxu0 0.0
        %592 = vmatpush1.msra.mxu0 %v563
        %593 = vmatprep.subr.mxu0 0.0
        %594 = vmatpush1.msra.mxu0 %v564
        %595 = vmatprep.subr.mxu0 0.0
        %596 = vmatpush1.msra.mxu0 %v565
        %597 = vmatprep.subr.mxu0 0.0
        %598 = vmatpush1.msra.mxu0 %v566
        %599 = vmatprep.subr.mxu0 0.0
        %600 = vmatpush1.msra.mxu0 0.0
        %601 = vmatprep.subr.mxu0 0.0
        %602 = vmatpush1.msra.mxu0 0.0
        %603 = vmatprep.subr.mxu0 0.0
        %604 = vmatpush1.msra.mxu0 0.0
        %605 = vmatprep.subr.mxu0 0.0
        %606 = vmatpush1.msra.mxu0 0.0
        %607 = vmatprep.subr.mxu0 0.0
        %608 = vmatpush1.msra.mxu0 0.0
        %609 = vmatprep.subr.mxu0 0.0
        %610 = vmatpush1.msra.mxu0 0.0
        %611 = vmatprep.subr.mxu0 0.0
        %612 = vmatpush1.msra.mxu0 0.0
        %613 = vmatprep.subr.mxu0 0.0
        %614 = vmatpush1.msra.mxu0 0.0
        %615 = vmatprep.subr.mxu0 0.0
        %616 = vmatpush1.msra.mxu0 0.0
        %617 = vmatprep.subr.mxu0 0.0
        %618 = vmatpush1.msra.mxu0 0.0
        %619 = vmatprep.subr.mxu0 0.0
        %620 = vmatpush1.msra.mxu0 0.0
        %621 = vmatprep.subr.mxu0 0.0
        %622 = vmatpush1.msra.mxu0 0.0
        %623 = vmatprep.subr.mxu0 0.0
        %624 = vmatpush1.msra.mxu0 0.0
        %625 = vmatprep.subr.mxu0 0.0
        %626 = vmatpush1.msra.mxu0 0.0
        %627 = vmatprep.subr.mxu0 0.0
        %628 = vmatpush1.msra.mxu0 0.0
        %629 = vmatprep.subr.mxu0 0.0
        %630 = vmatpush1.msra.mxu0 0.0
        %631 = vmatprep.mubr.f32.mxu0 0.0
        %632 = vmatmul.mubr.f32.gmra.mrb[0].mxu0 %v548
        %v633 = vpop.f32.mrb[0].mxu0
        %v634 = vadd.f32 0.0, %v633
        %v635 = vpop.f32.mrb[0].mxu0
        %636 = vmatprep.mubr.f32.mxu0 0.0
        %637 = vmatmul.mubr.f32.gmra.mrb[0].mxu0 %v549
        %v638 = vpop.f32.mrb[0].mxu0
        %v639 = vadd.f32 0.0, %v638
        %v640 = vpop.f32.mrb[0].mxu0
        %641 = vdwg.mxu0
        %v642 = vadd.f32 %v546, %v634
        %v643 = vadd.f32 %v547, %v639
        %v644 = vmax.f32 %v642, 0.0
        %v645 = vmax.f32 %v643, 0.0
        %vm646 = vcmask 254976
        %647 = vst.msk [vmem:[#allocation2] sm:$0x3] %vm646, 0.0
        %648 = vst.msk [vmem:[#allocation2 + $0x12] sm:$0x3] %vm646, 0.0
        %vm649 = vcmask 261120
        %650 = vst.msk [vmem:[#allocation2 + $0x2] sm:$0xff] %vm649, %v644
        %651 = vst.msk [vmem:[#allocation2 + $0xa] sm:$0xff] %vm649, %v645
        %v652 = vld [vmem:[#allocation2] sm:$0xff]
        %v653 = vld [vmem:[#allocation2 + $0x8] sm:$0xff]
        %v654 = vld [vmem:[%s2] sm:$0xff]
        %v655 = vld [vmem:[%s2 + $0x8] sm:$0xff]
        %v656 = vld [vmem:[%s2 + $0x10] sm:$0xff]
        %v657 = vld [vmem:[%s2 + $0x18] sm:$0xff]
        %v658 = vld [vmem:[#allocation2 + $0x1] sm:$0xff]
        %v659 = vld [vmem:[#allocation2 + $0x9] sm:$0xff]
        %s660 = scalar_lea.vmem %s2, 32
        %v661 = vld [vmem:[%s660] sm:$0xff]
        %v662 = vld [vmem:[%s660 + $0x8] sm:$0xff]
        %v663 = vld [vmem:[%s660 + $0x10] sm:$0xff]
        %v664 = vld [vmem:[%s660 + $0x18] sm:$0xff]
        %v666 = vsel %vm649, %v658, 0
        %v669 = vsel %vm649, %v659, 0
        %671 = vmatprep.subr.mxu0 0.0
        %672 = vmatpush1.msra.mxu0 %v661
        %673 = vmatprep.subr.mxu0 0.0
        %674 = vmatpush1.msra.mxu0 %v662
        %675 = vmatprep.subr.mxu0 0.0
        %676 = vmatpush1.msra.mxu0 %v663
        %677 = vmatprep.subr.mxu0 0.0
        %678 = vmatpush1.msra.mxu0 %v664
        %679 = vmatprep.subr.mxu0 0.0
        %680 = vmatpush1.msra.mxu0 0.0
        %681 = vmatprep.subr.mxu0 0.0
        %682 = vmatpush1.msra.mxu0 0.0
        %683 = vmatprep.subr.mxu0 0.0
        %684 = vmatpush1.msra.mxu0 0.0
        %685 = vmatprep.subr.mxu0 0.0
        %686 = vmatpush1.msra.mxu0 0.0
        %687 = vmatprep.subr.mxu0 0.0
        %688 = vmatpush1.msra.mxu0 0.0
        %689 = vmatprep.subr.mxu0 0.0
        %690 = vmatpush1.msra.mxu0 0.0
        %691 = vmatprep.subr.mxu0 0.0
        %692 = vmatpush1.msra.mxu0 0.0
        %693 = vmatprep.subr.mxu0 0.0
        %694 = vmatpush1.msra.mxu0 0.0
        %695 = vmatprep.subr.mxu0 0.0
        %696 = vmatpush1.msra.mxu0 0.0
        %697 = vmatprep.subr.mxu0 0.0
        %698 = vmatpush1.msra.mxu0 0.0
        %699 = vmatprep.subr.mxu0 0.0
        %700 = vmatpush1.msra.mxu0 0.0
        %701 = vmatprep.subr.mxu0 0.0
        %702 = vmatpush1.msra.mxu0 0.0
        %703 = vmatprep.subr.mxu0 0.0
        %704 = vmatpush1.msra.mxu0 0.0
        %705 = vmatprep.subr.mxu0 0.0
        %706 = vmatpush1.msra.mxu0 0.0
        %707 = vmatprep.subr.mxu0 0.0
        %708 = vmatpush1.msra.mxu0 0.0
        %709 = vmatprep.subr.mxu0 0.0
        %710 = vmatpush1.msra.mxu0 0.0
        %711 = vmatprep.subr.mxu0 0.0
        %712 = vmatpush1.msra.mxu0 0.0
        %713 = vmatprep.subr.mxu0 0.0
        %714 = vmatpush1.msra.mxu0 0.0
        %715 = vmatprep.subr.mxu0 0.0
        %716 = vmatpush1.msra.mxu0 0.0
        %717 = vmatprep.subr.mxu0 0.0
        %718 = vmatpush1.msra.mxu0 0.0
        %719 = vmatprep.subr.mxu0 0.0
        %720 = vmatpush1.msra.mxu0 0.0
        %721 = vmatprep.subr.mxu0 0.0
        %722 = vmatpush1.msra.mxu0 0.0
        %723 = vmatprep.subr.mxu0 0.0
        %724 = vmatpush1.msra.mxu0 0.0
        %725 = vmatprep.subr.mxu0 0.0
        %726 = vmatpush1.msra.mxu0 0.0
        %727 = vmatprep.subr.mxu0 0.0
        %728 = vmatpush1.msra.mxu0 0.0
        %729 = vmatprep.subr.mxu0 0.0
        %730 = vmatpush1.msra.mxu0 0.0
        %731 = vmatprep.subr.mxu0 0.0
        %732 = vmatpush1.msra.mxu0 0.0
        %733 = vmatprep.subr.mxu0 0.0
        %734 = vmatpush1.msra.mxu0 0.0
        %735 = vmatprep.mubr.f32.mxu0 0.0
        %736 = vmatmul.mubr.f32.gmra.mrb[0].mxu0 %v666
        %v737 = vpop.f32.mrb[0].mxu0
        %v738 = vadd.f32 0.0, %v737
        %v739 = vpop.f32.mrb[0].mxu0
        %740 = vmatprep.mubr.f32.mxu0 0.0
        %741 = vmatmul.mubr.f32.gmra.mrb[0].mxu0 %v669
        %v742 = vpop.f32.mrb[0].mxu0
        %v743 = vadd.f32 0.0, %v742
        %v744 = vpop.f32.mrb[0].mxu0
        %745 = vdwg.mxu0
        %v747 = vsel %vm649, %v652, 0
        %v750 = vsel %vm649, %v653, 0
        %752 = vmatprep.subr.mxu0 0.0
        %753 = vmatpush1.msra.mxu0 %v654
        %754 = vmatprep.subr.mxu0 0.0
        %755 = vmatpush1.msra.mxu0 %v655
        %756 = vmatprep.subr.mxu0 0.0
        %757 = vmatpush1.msra.mxu0 %v656
        %758 = vmatprep.subr.mxu0 0.0
        %759 = vmatpush1.msra.mxu0 %v657
        %760 = vmatprep.subr.mxu0 0.0
        %761 = vmatpush1.msra.mxu0 0.0
        %762 = vmatprep.subr.mxu0 0.0
        %763 = vmatpush1.msra.mxu0 0.0
        %764 = vmatprep.subr.mxu0 0.0
        %765 = vmatpush1.msra.mxu0 0.0
        %766 = vmatprep.subr.mxu0 0.0
        %767 = vmatpush1.msra.mxu0 0.0
        %768 = vmatprep.subr.mxu0 0.0
        %769 = vmatpush1.msra.mxu0 0.0
        %770 = vmatprep.subr.mxu0 0.0
        %771 = vmatpush1.msra.mxu0 0.0
        %772 = vmatprep.subr.mxu0 0.0
        %773 = vmatpush1.msra.mxu0 0.0
        %774 = vmatprep.subr.mxu0 0.0
        %775 = vmatpush1.msra.mxu0 0.0
        %776 = vmatprep.subr.mxu0 0.0
        %777 = vmatpush1.msra.mxu0 0.0
        %778 = vmatprep.subr.mxu0 0.0
        %779 = vmatpush1.msra.mxu0 0.0
        %780 = vmatprep.subr.mxu0 0.0
        %781 = vmatpush1.msra.mxu0 0.0
        %782 = vmatprep.subr.mxu0 0.0
        %783 = vmatpush1.msra.mxu0 0.0
        %784 = vmatprep.subr.mxu0 0.0
        %785 = vmatpush1.msra.mxu0 0.0
        %786 = vmatprep.subr.mxu0 0.0
        %787 = vmatpush1.msra.mxu0 0.0
        %788 = vmatprep.subr.mxu0 0.0
        %789 = vmatpush1.msra.mxu0 0.0
        %790 = vmatprep.subr.mxu0 0.0
        %791 = vmatpush1.msra.mxu0 0.0
        %792 = vmatprep.subr.mxu0 0.0
        %793 = vmatpush1.msra.mxu0 0.0
        %794 = vmatprep.subr.mxu0 0.0
        %795 = vmatpush1.msra.mxu0 0.0
        %796 = vmatprep.subr.mxu0 0.0
        %797 = vmatpush1.msra.mxu0 0.0
        %798 = vmatprep.subr.mxu0 0.0
        %799 = vmatpush1.msra.mxu0 0.0
        %800 = vmatprep.subr.mxu0 0.0
        %801 = vmatpush1.msra.mxu0 0.0
        %802 = vmatprep.subr.mxu0 0.0
        %803 = vmatpush1.msra.mxu0 0.0
        %804 = vmatprep.subr.mxu0 0.0
        %805 = vmatpush1.msra.mxu0 0.0
        %806 = vmatprep.subr.mxu0 0.0
        %807 = vmatpush1.msra.mxu0 0.0
        %808 = vmatprep.subr.mxu0 0.0
        %809 = vmatpush1.msra.mxu0 0.0
        %810 = vmatprep.subr.mxu0 0.0
        %811 = vmatpush1.msra.mxu0 0.0
        %812 = vmatprep.subr.mxu0 0.0
        %813 = vmatpush1.msra.mxu0 0.0
        %814 = vmatprep.subr.mxu0 0.0
        %815 = vmatpush1.msra.mxu0 0.0
        %816 = vmatprep.mubr.f32.mxu0 0.0
        %817 = vmatmul.mubr.f32.gmra.mrb[0].mxu0 %v747
        %v818 = vpop.f32.mrb[0].mxu0
        %v819 = vadd.f32 %v738, %v818
        %v820 = vpop.f32.mrb[0].mxu0
        %821 = vmatprep.mubr.f32.mxu0 0.0
        %822 = vmatmul.mubr.f32.gmra.mrb[0].mxu0 %v750
        %v823 = vpop.f32.mrb[0].mxu0
        %v824 = vadd.f32 %v743, %v823
        %v825 = vpop.f32.mrb[0].mxu0
        %826 = vdwg.mxu0
        %v827 = vld [vmem:[#allocation2 + $0x2] sm:$0xff]
        %v828 = vld [vmem:[#allocation2 + $0xa] sm:$0xff]
        %s829 = scalar_lea.vmem %s2, 64
        %v830 = vld [vmem:[%s829] sm:$0xff]
        %v831 = vld [vmem:[%s829 + $0x8] sm:$0xff]
        %v832 = vld [vmem:[%s829 + $0x10] sm:$0xff]
        %v833 = vld [vmem:[%s829 + $0x18] sm:$0xff]
        %v835 = vsel %vm649, %v827, 0
        %v838 = vsel %vm649, %v828, 0
        %840 = vmatprep.subr.mxu0 0.0
        %841 = vmatpush1.msra.mxu0 %v830
        %842 = vmatprep.subr.mxu0 0.0
        %843 = vmatpush1.msra.mxu0 %v831
        %844 = vmatprep.subr.mxu0 0.0
        %845 = vmatpush1.msra.mxu0 %v832
        %846 = vmatprep.subr.mxu0 0.0
        %847 = vmatpush1.msra.mxu0 %v833
        %848 = vmatprep.subr.mxu0 0.0
        %849 = vmatpush1.msra.mxu0 0.0
        %850 = vmatprep.subr.mxu0 0.0
        %851 = vmatpush1.msra.mxu0 0.0
        %852 = vmatprep.subr.mxu0 0.0
        %853 = vmatpush1.msra.mxu0 0.0
        %854 = vmatprep.subr.mxu0 0.0
        %855 = vmatpush1.msra.mxu0 0.0
        %856 = vmatprep.subr.mxu0 0.0
        %857 = vmatpush1.msra.mxu0 0.0
        %858 = vmatprep.subr.mxu0 0.0
        %859 = vmatpush1.msra.mxu0 0.0
        %860 = vmatprep.subr.mxu0 0.0
        %861 = vmatpush1.msra.mxu0 0.0
        %862 = vmatprep.subr.mxu0 0.0
        %863 = vmatpush1.msra.mxu0 0.0
        %864 = vmatprep.subr.mxu0 0.0
        %865 = vmatpush1.msra.mxu0 0.0
        %866 = vmatprep.subr.mxu0 0.0
        %867 = vmatpush1.msra.mxu0 0.0
        %868 = vmatprep.subr.mxu0 0.0
        %869 = vmatpush1.msra.mxu0 0.0
        %870 = vmatprep.subr.mxu0 0.0
        %871 = vmatpush1.msra.mxu0 0.0
        %872 = vmatprep.subr.mxu0 0.0
        %873 = vmatpush1.msra.mxu0 0.0
        %874 = vmatprep.subr.mxu0 0.0
        %875 = vmatpush1.msra.mxu0 0.0
        %876 = vmatprep.subr.mxu0 0.0
        %877 = vmatpush1.msra.mxu0 0.0
        %878 = vmatprep.subr.mxu0 0.0
        %879 = vmatpush1.msra.mxu0 0.0
        %880 = vmatprep.subr.mxu0 0.0
        %881 = vmatpush1.msra.mxu0 0.0
        %882 = vmatprep.subr.mxu0 0.0
        %883 = vmatpush1.msra.mxu0 0.0
        %884 = vmatprep.subr.mxu0 0.0
        %885 = vmatpush1.msra.mxu0 0.0
        %886 = vmatprep.subr.mxu0 0.0
        %887 = vmatpush1.msra.mxu0 0.0
        %888 = vmatprep.subr.mxu0 0.0
        %889 = vmatpush1.msra.mxu0 0.0
        %890 = vmatprep.subr.mxu0 0.0
        %891 = vmatpush1.msra.mxu0 0.0
        %892 = vmatprep.subr.mxu0 0.0
        %893 = vmatpush1.msra.mxu0 0.0
        %894 = vmatprep.subr.mxu0 0.0
        %895 = vmatpush1.msra.mxu0 0.0
        %896 = vmatprep.subr.mxu0 0.0
        %897 = vmatpush1.msra.mxu0 0.0
        %898 = vmatprep.subr.mxu0 0.0
        %899 = vmatpush1.msra.mxu0 0.0
        %900 = vmatprep.subr.mxu0 0.0
        %901 = vmatpush1.msra.mxu0 0.0
        %902 = vmatprep.subr.mxu0 0.0
        %903 = vmatpush1.msra.mxu0 0.0
        %904 = vmatprep.mubr.f32.mxu0 0.0
        %905 = vmatmul.mubr.f32.gmra.mrb[0].mxu0 %v835
        %v906 = vpop.f32.mrb[0].mxu0
        %v907 = vadd.f32 0.0, %v906
        %v908 = vpop.f32.mrb[0].mxu0
        %909 = vmatprep.mubr.f32.mxu0 0.0
        %910 = vmatmul.mubr.f32.gmra.mrb[0].mxu0 %v838
        %v911 = vpop.f32.mrb[0].mxu0
        %v912 = vadd.f32 0.0, %v911
        %v913 = vpop.f32.mrb[0].mxu0
        %914 = vdwg.mxu0
        %v915 = vadd.f32 %v819, %v907
        %v916 = vadd.f32 %v824, %v912
        %v917 = vld [vmem:[#allocation2 + $0x3] sm:$0xff]
        %v918 = vld [vmem:[#allocation2 + $0xb] sm:$0xff]
        %s919 = scalar_lea.vmem %s2, 96
        %v920 = vld [vmem:[%s919] sm:$0xff]
        %v921 = vld [vmem:[%s919 + $0x8] sm:$0xff]
        %v922 = vld [vmem:[%s919 + $0x10] sm:$0xff]
        %v923 = vld [vmem:[%s919 + $0x18] sm:$0xff]
        %v925 = vsel %vm649, %v917, 0
        %v928 = vsel %vm649, %v918, 0
        %930 = vmatprep.subr.mxu0 0.0
        %931 = vmatpush1.msra.mxu0 %v920
        %932 = vmatprep.subr.mxu0 0.0
        %933 = vmatpush1.msra.mxu0 %v921
        %934 = vmatprep.subr.mxu0 0.0
        %935 = vmatpush1.msra.mxu0 %v922
        %936 = vmatprep.subr.mxu0 0.0
        %937 = vmatpush1.msra.mxu0 %v923
        %938 = vmatprep.subr.mxu0 0.0
        %939 = vmatpush1.msra.mxu0 0.0
        %940 = vmatprep.subr.mxu0 0.0
        %941 = vmatpush1.msra.mxu0 0.0
        %942 = vmatprep.subr.mxu0 0.0
        %943 = vmatpush1.msra.mxu0 0.0
        %944 = vmatprep.subr.mxu0 0.0
        %945 = vmatpush1.msra.mxu0 0.0
        %946 = vmatprep.subr.mxu0 0.0
        %947 = vmatpush1.msra.mxu0 0.0
        %948 = vmatprep.subr.mxu0 0.0
        %949 = vmatpush1.msra.mxu0 0.0
        %950 = vmatprep.subr.mxu0 0.0
        %951 = vmatpush1.msra.mxu0 0.0
        %952 = vmatprep.subr.mxu0 0.0
        %953 = vmatpush1.msra.mxu0 0.0
        %954 = vmatprep.subr.mxu0 0.0
        %955 = vmatpush1.msra.mxu0 0.0
        %956 = vmatprep.subr.mxu0 0.0
        %957 = vmatpush1.msra.mxu0 0.0
        %958 = vmatprep.subr.mxu0 0.0
        %959 = vmatpush1.msra.mxu0 0.0
        %960 = vmatprep.subr.mxu0 0.0
        %961 = vmatpush1.msra.mxu0 0.0
        %962 = vmatprep.subr.mxu0 0.0
        %963 = vmatpush1.msra.mxu0 0.0
        %964 = vmatprep.subr.mxu0 0.0
        %965 = vmatpush1.msra.mxu0 0.0
        %966 = vmatprep.subr.mxu0 0.0
        %967 = vmatpush1.msra.mxu0 0.0
        %968 = vmatprep.subr.mxu0 0.0
        %969 = vmatpush1.msra.mxu0 0.0
        %970 = vmatprep.subr.mxu0 0.0
        %971 = vmatpush1.msra.mxu0 0.0
        %972 = vmatprep.subr.mxu0 0.0
        %973 = vmatpush1.msra.mxu0 0.0
        %974 = vmatprep.subr.mxu0 0.0
        %975 = vmatpush1.msra.mxu0 0.0
        %976 = vmatprep.subr.mxu0 0.0
        %977 = vmatpush1.msra.mxu0 0.0
        %978 = vmatprep.subr.mxu0 0.0
        %979 = vmatpush1.msra.mxu0 0.0
        %980 = vmatprep.subr.mxu0 0.0
        %981 = vmatpush1.msra.mxu0 0.0
        %982 = vmatprep.subr.mxu0 0.0
        %983 = vmatpush1.msra.mxu0 0.0
        %984 = vmatprep.subr.mxu0 0.0
        %985 = vmatpush1.msra.mxu0 0.0
        %986 = vmatprep.subr.mxu0 0.0
        %987 = vmatpush1.msra.mxu0 0.0
        %988 = vmatprep.subr.mxu0 0.0
        %989 = vmatpush1.msra.mxu0 0.0
        %990 = vmatprep.subr.mxu0 0.0
        %991 = vmatpush1.msra.mxu0 0.0
        %992 = vmatprep.subr.mxu0 0.0
        %993 = vmatpush1.msra.mxu0 0.0
        %994 = vmatprep.mubr.f32.mxu0 0.0
        %995 = vmatmul.mubr.f32.gmra.mrb[0].mxu0 %v925
        %v996 = vpop.f32.mrb[0].mxu0
        %v997 = vadd.f32 0.0, %v996
        %v998 = vpop.f32.mrb[0].mxu0
        %999 = vmatprep.mubr.f32.mxu0 0.0
        %1000 = vmatmul.mubr.f32.gmra.mrb[0].mxu0 %v928
        %v1001 = vpop.f32.mrb[0].mxu0
        %v1002 = vadd.f32 0.0, %v1001
        %v1003 = vpop.f32.mrb[0].mxu0
        %1004 = vdwg.mxu0
        %v1005 = vadd.f32 %v915, %v997
        %v1006 = vadd.f32 %v916, %v1002
        %v1007 = vld [vmem:[#allocation2 + $0x4] sm:$0xff]
        %v1008 = vld [vmem:[#allocation2 + $0xc] sm:$0xff]
        %s1009 = scalar_lea.vmem %s2, 128
        %v1010 = vld [vmem:[%s1009] sm:$0xff]
        %v1011 = vld [vmem:[%s1009 + $0x8] sm:$0xff]
        %v1012 = vld [vmem:[%s1009 + $0x10] sm:$0xff]
        %v1013 = vld [vmem:[%s1009 + $0x18] sm:$0xff]
        %v1015 = vsel %vm649, %v1007, 0
        %v1018 = vsel %vm649, %v1008, 0
        %1020 = vmatprep.subr.mxu0 0.0
        %1021 = vmatpush1.msra.mxu0 %v1010
        %1022 = vmatprep.subr.mxu0 0.0
        %1023 = vmatpush1.msra.mxu0 %v1011
        %1024 = vmatprep.subr.mxu0 0.0
        %1025 = vmatpush1.msra.mxu0 %v1012
        %1026 = vmatprep.subr.mxu0 0.0
        %1027 = vmatpush1.msra.mxu0 %v1013
        %1028 = vmatprep.subr.mxu0 0.0
        %1029 = vmatpush1.msra.mxu0 0.0
        %1030 = vmatprep.subr.mxu0 0.0
        %1031 = vmatpush1.msra.mxu0 0.0
        %1032 = vmatprep.subr.mxu0 0.0
        %1033 = vmatpush1.msra.mxu0 0.0
        %1034 = vmatprep.subr.mxu0 0.0
        %1035 = vmatpush1.msra.mxu0 0.0
        %1036 = vmatprep.subr.mxu0 0.0
        %1037 = vmatpush1.msra.mxu0 0.0
        %1038 = vmatprep.subr.mxu0 0.0
        %1039 = vmatpush1.msra.mxu0 0.0
        %1040 = vmatprep.subr.mxu0 0.0
        %1041 = vmatpush1.msra.mxu0 0.0
        %1042 = vmatprep.subr.mxu0 0.0
        %1043 = vmatpush1.msra.mxu0 0.0
        %1044 = vmatprep.subr.mxu0 0.0
        %1045 = vmatpush1.msra.mxu0 0.0
        %1046 = vmatprep.subr.mxu0 0.0
        %1047 = vmatpush1.msra.mxu0 0.0
        %1048 = vmatprep.subr.mxu0 0.0
        %1049 = vmatpush1.msra.mxu0 0.0
        %1050 = vmatprep.subr.mxu0 0.0
        %1051 = vmatpush1.msra.mxu0 0.0
        %1052 = vmatprep.subr.mxu0 0.0
        %1053 = vmatpush1.msra.mxu0 0.0
        %1054 = vmatprep.subr.mxu0 0.0
        %1055 = vmatpush1.msra.mxu0 0.0
        %1056 = vmatprep.subr.mxu0 0.0
        %1057 = vmatpush1.msra.mxu0 0.0
        %1058 = vmatprep.subr.mxu0 0.0
        %1059 = vmatpush1.msra.mxu0 0.0
        %1060 = vmatprep.subr.mxu0 0.0
        %1061 = vmatpush1.msra.mxu0 0.0
        %1062 = vmatprep.subr.mxu0 0.0
        %1063 = vmatpush1.msra.mxu0 0.0
        %1064 = vmatprep.subr.mxu0 0.0
        %1065 = vmatpush1.msra.mxu0 0.0
        %1066 = vmatprep.subr.mxu0 0.0
        %1067 = vmatpush1.msra.mxu0 0.0
        %1068 = vmatprep.subr.mxu0 0.0
        %1069 = vmatpush1.msra.mxu0 0.0
        %1070 = vmatprep.subr.mxu0 0.0
        %1071 = vmatpush1.msra.mxu0 0.0
        %1072 = vmatprep.subr.mxu0 0.0
        %1073 = vmatpush1.msra.mxu0 0.0
        %1074 = vmatprep.subr.mxu0 0.0
        %1075 = vmatpush1.msra.mxu0 0.0
        %1076 = vmatprep.subr.mxu0 0.0
        %1077 = vmatpush1.msra.mxu0 0.0
        %1078 = vmatprep.subr.mxu0 0.0
        %1079 = vmatpush1.msra.mxu0 0.0
        %1080 = vmatprep.subr.mxu0 0.0
        %1081 = vmatpush1.msra.mxu0 0.0
        %1082 = vmatprep.subr.mxu0 0.0
        %1083 = vmatpush1.msra.mxu0 0.0
        %1084 = vmatprep.mubr.f32.mxu0 0.0
        %1085 = vmatmul.mubr.f32.gmra.mrb[0].mxu0 %v1015
        %v1086 = vpop.f32.mrb[0].mxu0
        %v1087 = vadd.f32 0.0, %v1086
        %v1088 = vpop.f32.mrb[0].mxu0
        %1089 = vmatprep.mubr.f32.mxu0 0.0
        %1090 = vmatmul.mubr.f32.gmra.mrb[0].mxu0 %v1018
        %v1091 = vpop.f32.mrb[0].mxu0
        %v1092 = vadd.f32 0.0, %v1091
        %v1093 = vpop.f32.mrb[0].mxu0
        %1094 = vdwg.mxu0
        %v1095 = vadd.f32 %v1005, %v1087
        %v1096 = vadd.f32 %v1006, %v1092
        %v1097 = vld [vmem:[%s168 + $0x2] sm:$0xff]
        %v1098 = vld [vmem:[%s168 + $0xa] sm:$0xff]
        %v1099 = vadd.f32 %v1095, %v1097
        %v1100 = vadd.f32 %v1096, %v1098
        %1101 = vst [vmem:[%s163] sm:$0xff] %v1099
        %1102 = vst [vmem:[%s163 + $0x8] sm:$0xff] %v1100
        %s1103 = sand.u32 %s93, 1
        %s1104 = scalar_lea.sflag [#allocation4], %s1103
        %s1105 = sand.u32 %s93, 1
        %s1106 = smul.addr %s1105, 16
        %s1107 = scalar_lea.vmem [#allocation3], %s1106
        // Predicated region
        $region33: #{tpu_custom_call.1} parent=31 // pred_check
          %p1108 = pneg %p103
        $region34: #{tpu_custom_call.1} parent=31 // pred_check_branch
          %1110 = sbr.rel (%p1108) target = $region36
        $region35: #{tpu_custom_call.1} parent=31 // pred_region
          %s1112 = ssub.s32 256, 256
          %1113 = vsyncadd %s1104, %s1112
          %s1114 = smul.addr %s17, 2
          %s1115 = smul.addr %s1114, 128
          %s1116 = scalar_lea.hbm %s3, %s1115
          %s1117 = sshll.u32 %s1107, 4
          %s1118 = int_to_ptr.vmem [resolvable:$true] %s1117
          %1123 = dma.vmem_to_hbm [thread:$0]  %s1118, 256, %s1116, %s1104, 128, 128, 8
        $region36: #{tpu_custom_call.1} parent=31 // pred_fallthru
          _
      $region32: #{tpu_custom_call.1} parent=5 // pred_fallthru
        _
      %p1124 = scmp.le.s32.totalorder 2, %s12
      // Predicated region
      $region37: #{tpu_custom_call.1} parent=5 // pred_check
        %p1125 = pneg %p1124
      $region38: #{tpu_custom_call.1} parent=5 // pred_check_branch
        %1127 = sbr.rel (%p1125) target = $region40
      $region39: #{tpu_custom_call.1} parent=5 // pred_region
        %s1128 = ssub.s32 %s12, 2
        // Predicated region
        $region41: #{tpu_custom_call.1} parent=39 // pred_check
          %p1129 = pneg %p109
        $region42: #{tpu_custom_call.1} parent=39 // pred_check_branch
          %1131 = sbr.rel (%p1129) target = $region44
        $region43: #{tpu_custom_call.1} parent=39 // pred_region
          %s1132 = sand.u32 %s94, 1
          %s1133 = scalar_lea.sflag [#allocation4], %s1132
          %s1134 = sand.u32 %s94, 1
          %s1135 = smul.addr %s1134, 16
          %s1136 = scalar_lea.vmem [#allocation3], %s1135
          %1137 = dma.done %s1133, 256
        $region44: #{tpu_custom_call.1} parent=39 // pred_fallthru
          _
      $region40: #{tpu_custom_call.1} parent=5 // pred_fallthru
        _
    $region6: #{tpu_custom_call.1} parent=1 // loop_footer
      %s16 = sadd.s32 1, %s12
    $region7: #{tpu_custom_call.1} parent=1 // loop_footer_branch
      %11 = sbr.rel target = $region3
    $region8: #{tpu_custom_call.1} parent=1 // loop_exit
      _
    %1138 = vsyncpa [#allocation4], 1
    %s1139 = scalar_lea.sflag [#allocation4], 1
    %1140 = vsyncpa %s1139, 1

</llo_original>
